<compile_context>
chip_gen: v7x
topology: tpu7x:2x2x1
jax: 0.10.0
libtpu: 0.0.40
codegen_flags: <defaults>
</compile_context>

<pallas_src>
import math

import jax
import jax.numpy as jnp
from jax import lax
from jax.experimental import pallas as pl
from jax.experimental.pallas import tpu as pltpu


# --------------------------------------------------------------------------- #
# helpers
# --------------------------------------------------------------------------- #
def _round_up(x: int, m: int) -> int:
    return (x + m - 1) // m * m


def _vmem_capacity_bytes() -> int:
    try:
        return int(pltpu.get_tpu_info().vmem_capacity_bytes)
    except Exception:
        return 64 << 20          # conservative fallback (v7x per-core VMEM)


def _input_budget_bytes(cap: int) -> int:
    # Total bytes allowed for the double-buffered big input (both buffers).
    return min(40 << 20, cap // 2)


def _vmem_limit(footprint: int, cap: int) -> int:
    # Explicit scoped-VMEM limit: pipeline footprint + slack, clamped so we
    # always leave headroom for compiler scratch (and never exceed ~48 MiB).
    limit = max(footprint + (4 << 20), 16 << 20)
    return int(min(limit, 48 << 20, max(cap - (16 << 20), 16 << 20)))


# --------------------------------------------------------------------------- #
# kernels
# --------------------------------------------------------------------------- #
def _rowdot_kernel(x_ref, w_ref, o_ref):
    # x_ref: (tb, n) native dtype; w_ref: (1, n) f32; o_ref: (1, 1, tb) f32.
    x = x_ref[...].astype(jnp.float32)        # upcast AFTER the DMA (VMEM tile stays native)
    s = jnp.sum(x * w_ref[...], axis=-1)      # VPU multiply + XLU lane reduce -> (tb,)
    o_ref[...] = s[None, None, :]             # lane-dense (1, 1, tb) store


def _packed_kernel(xp_ref, wblk_ref, o_ref):
    # xp_ref: (tb, k*n) native dtype (k logical rows packed per VMEM row);
    # wblk_ref: (k*n, k) f32 block-diagonal weight; o_ref: (tb, k) f32.
    x = xp_ref[...].astype(jnp.float32)
    # MXU matmul.  HIGHEST keeps the f32-exact multi-pass algorithm so results
    # match the torch f32 reference; with k <= 128 the kernel stays HBM-bound.
    o_ref[...] = jnp.dot(x, wblk_ref[...],
                         preferred_element_type=jnp.float32,
                         precision=lax.Precision.HIGHEST)


# --------------------------------------------------------------------------- #
# wrappers
# --------------------------------------------------------------------------- #
def _pack_factor(b: int, n: int):
    """Rows packed per VMEM row for the small-n path, or None if inapplicable."""
    if n >= 128 or n <= 0 or b <= 0:
        return None
    kb = 128 // math.gcd(n, 128)              # smallest k with (k*n) % 128 == 0
    for k in (_round_up(64, kb), _round_up(128, kb)):
        if b % k == 0:
            return k
    return None


def _forward_rowdot(x: jax.Array, w: jax.Array) -> jax.Array:
    """General path: one x row per VMEM row, VPU multiply + lane reduce."""
    b, n = x.shape
    cap = _vmem_capacity_bytes()
    itemsize = x.dtype.itemsize
    row_lanes = _round_up(max(n, 1), 128)     # lane-padded VMEM width of one row
    per_buf = _input_budget_bytes(cap) // 2   # one of the two x pipeline buffers

    tb_fit = per_buf // (row_lanes * itemsize)
    if tb_fit >= 128:
        tb_cap = tb_fit // 128 * 128          # keep the output block lane-dense
    else:
        tb_cap = max(8, tb_fit // 8 * 8)      # very wide rows: fall back to 8-row tiles

    if b <= 8:
        tb = b                                # full-array block (always legal)
    elif b <= 256:
        tb = min(tb_cap, _round_up(b, 8))     # single small tile; lane density irrelevant
    else:
        # >=2 tiles so the ("parallel",) axis can shard across v7x's 2 cores;
        # multiple of 128 keeps the (1, 1, tb) output stores unmasked.
        tb = min(tb_cap, _round_up(pl.cdiv(b, 2), 128))
    num_tiles = pl.cdiv(b, tb)                # ragged tail handled by the grid, NOT jnp.pad

    footprint = (2 * tb * row_lanes * itemsize          # x double buffer (native dtype)
                 + 2 * _round_up(tb, 128) * 4           # output double buffer
                 + 2 * 8 * row_lanes * 4)               # weight block
    w2d = w.astype(jnp.float32).reshape(1, n)

    out = pl.pallas_call(
        _rowdot_kernel,
        out_shape=jax.ShapeDtypeStruct((num_tiles, 1, tb), jnp.float32),
        grid_spec=pltpu.PrefetchScalarGridSpec(
            num_scalar_prefetch=0,
            grid=(num_tiles,),
            in_specs=[
                pl.BlockSpec((tb, n), lambda i: (i, 0)),    # batch tile (double-buffered)
                pl.BlockSpec((1, n), lambda i: (0, 0)),     # weight (same block each step)
            ],
            out_specs=pl.BlockSpec((1, 1, tb), lambda i: (i, 0, 0)),
        ),
        compiler_params=pltpu.CompilerParams(
            dimension_semantics=("parallel",),              # megacore-shard the batch axis
            vmem_limit_bytes=_vmem_limit(footprint, cap),
        ),
    )(x, w2d)

    # Outputs of the (garbage) ragged-tail rows are discarded here.
    return out.reshape(num_tiles * tb)[:b]


def _forward_packed(x: jax.Array, w: jax.Array, k: int) -> jax.Array:
    """Small-n path: k rows packed per VMEM row + block-diagonal MXU matmul."""
    b, n = x.shape
    rows = b // k                              # b % k == 0 guaranteed by caller
    kn = k * n                                 # multiple of 128 by construction
    cap = _vmem_capacity_bytes()
    itemsize = x.dtype.itemsize
    per_buf = _input_budget_bytes(cap) // 2

    tb_cap = max(8, per_buf // (kn * itemsize) // 8 * 8)
    if rows <= 8:
        tb = rows
    elif rows <= 256:
        tb = min(tb_cap, _round_up(rows, 8))
    else:
        tb = min(tb_cap, _round_up(pl.cdiv(rows, 2), 8))   # >=2 tiles for megacore
    num_tiles = pl.cdiv(rows, tb)

    # Free, layout-preserving reshape: each packed row is k*n contiguous HBM
    # elements -> full-width DMA, no dead lanes (vs. 118/128 dead at n=10).
    xp = x.reshape(rows, kn)
    # (k*n, k) block-diagonal weight: column j carries w in rows j*n..(j+1)*n-1,
    # so (xp @ wblk)[r, j] == sum_i x[r*k + j, i] * w[i].
    wblk = jnp.kron(jnp.eye(k, dtype=jnp.float32),
                    w.astype(jnp.float32).reshape(n, 1))

    out_lanes = _round_up(k, 128)
    footprint = (2 * tb * kn * itemsize        # packed-x double buffer (native dtype)
                 + 2 * tb * out_lanes * 4      # output double buffer
                 + 2 * kn * out_lanes * 4)     # block-diagonal weight

    out = pl.pallas_call(
        _packed_kernel,
        out_shape=jax.ShapeDtypeStruct((num_tiles * tb, k), jnp.float32),
        grid_spec=pltpu.PrefetchScalarGridSpec(
            num_scalar_prefetch=0,
            grid=(num_tiles,),
            in_specs=[
                pl.BlockSpec((tb, kn), lambda i: (i, 0)),   # packed batch tile
                pl.BlockSpec((kn, k), lambda i: (0, 0)),    # block-diagonal weight
            ],
            out_specs=pl.BlockSpec((tb, k), lambda i: (i, 0)),
        ),
        compiler_params=pltpu.CompilerParams(
            dimension_semantics=("parallel",),
            vmem_limit_bytes=_vmem_limit(footprint, cap),
        ),
    )(xp, wblk)

    # out[r, j] == y[r*k + j]; flatten row-major, drop ragged-tail rows.
    return out.reshape(num_tiles * tb * k)[:b]


def inner_product_forward(x: jax.Array, w: jax.Array) -> jax.Array:
    """Pallas implementation of InnerProductModel.forward.

    x: (batch, n), any float dtype; w: (n,) -- the arange(n) "layer" weight.
    Returns (batch,) float32, matching torch F.linear's 1-D-weight dim drop.
    """
    b, n = x.shape
    k = _pack_factor(b, n)
    if k is not None:
        return _forward_packed(x, w, k)
    return _forward_rowdot(x, w)


# --------------------------------------------------------------------------- #
# self-test
# --------------------------------------------------------------------------- #
if __name__ == "__main__":
    key = jax.random.PRNGKey(0)
    k1, k2, k3, k4 = jax.random.split(key, 4)

    def _ref(x, w):
        # Pure-VPU f32 reference (avoids any XLA matmul-precision ambiguity).
        return jnp.sum(x.astype(jnp.float32) * w.astype(jnp.float32)[None, :], axis=-1)

    # Module default: n = 10, layer.weight = arange(n).
    # (head.weight = arange(1, 2) exists in the module but is unused in forward.)
    n = 10
    w = jnp.arange(n, dtype=jnp.float32)

    # 1) tiny batch -> general path, single full block.
    x_small = jax.random.normal(k1, (4, n), dtype=jnp.float32)
    y = jax.block_until_ready(inner_product_forward(x_small, w))
    assert y.shape == (4,)
    assert jnp.allclose(y, _ref(x_small, w), rtol=1e-4, atol=1e-2)

    # 2) batch divisible by the pack factor -> packed MXU path (f32 input).
    x_big = jax.random.normal(k2, (2048, n), dtype=jnp.float32)
    y = jax.block_until_ready(inner_product_forward(x_big, w))
    assert y.shape == (2048,)
    assert jnp.allclose(y, _ref(x_big, w), rtol=1e-4, atol=1e-2)

    # 2b) same shapes, bf16 input (native-dtype tile budgeting + in-kernel upcast).
    x_bf16 = x_big.astype(jnp.bfloat16)
    y = jax.block_until_ready(inner_product_forward(x_bf16, w))
    assert jnp.allclose(y, _ref(x_bf16, w), rtol=1e-4, atol=1e-2)

    # 3) ragged batch, small n -> general path with a partial boundary block (no pad).
    x_rag = jax.random.normal(k3, (50, n), dtype=jnp.float32)
    y = jax.block_until_ready(inner_product_forward(x_rag, w))
    assert y.shape == (50,)
    assert jnp.allclose(y, _ref(x_rag, w), rtol=1e-4, atol=1e-2)

    # 4) wide rows, ragged batch -> general multi-tile path with cdiv tail handling.
    n4 = 256
    w4 = jnp.arange(n4, dtype=jnp.float32)
    x_wide = jax.random.normal(k4, (300, n4), dtype=jnp.float32)
    y = jax.block_until_ready(inner_product_forward(x_wide, w4))
    assert y.shape == (300,)
    assert jnp.allclose(y, _ref(x_wide, w4), rtol=1e-4, atol=1e-2)

    print("KERNEL_OK")
</pallas_src>

<mosaic_0001>
module attributes {stable_mosaic.version = 11 : i64} {
  func.func @_rowdot_kernel(%arg0: i32, %arg1: memref<4x10xf32, #tpu.memory_space<vmem>>, %arg2: memref<1x10xf32, #tpu.memory_space<vmem>>, %arg3: memref<1x1x4xf32, #tpu.memory_space<vmem>>) attributes {dimension_semantics = [#tpu.dimension_semantics<parallel>], iteration_bounds = array<i64: 1>, scalar_prefetch = 0 : i64, scratch_operands = 0 : i64, tpu.core_type = #tpu.core_type<tc>, window_params = [{transform_indices = @transform_0, window_bounds = array<i64: 4, 10>}, {pipeline_mode = #tpu.pipeline_mode<synchronous>, transform_indices = @transform_1, window_bounds = array<i64: 1, 10>}, {transform_indices = @transform_2, window_bounds = array<i64: 1, 1, 4>}]} {
    %c0 = arith.constant 0 : index
    %c0_0 = arith.constant 0 : index
    %0 = vector.load %arg1[%c0, %c0_0] : memref<4x10xf32, #tpu.memory_space<vmem>>, vector<4x10xf32>
    %c0_1 = arith.constant 0 : index
    %c0_2 = arith.constant 0 : index
    %1 = vector.load %arg2[%c0_1, %c0_2] : memref<1x10xf32, #tpu.memory_space<vmem>>, vector<1x10xf32>
    %2 = vector.broadcast %1 : vector<1x10xf32> to vector<4x10xf32>
    %3 = arith.mulf %0, %2 : vector<4x10xf32>
    %cst = arith.constant dense<0.000000e+00> : vector<4xf32>
    %4 = vector.multi_reduction <add>, %3, %cst [1] : vector<4x10xf32> to vector<4xf32>
    %5 = vector.shape_cast %4 : vector<4xf32> to vector<1x1x4xf32>
    %c0_3 = arith.constant 0 : index
    %c0_4 = arith.constant 0 : index
    %c0_5 = arith.constant 0 : index
    %6 = vector.load %arg3[%c0_3, %c0_4, %c0_5] : memref<1x1x4xf32, #tpu.memory_space<vmem>>, vector<1x1x4xf32>
    tpu.vector_store %arg3[%c0_3, %c0_4, %c0_5], %5 {strides = array<i32>} : memref<1x1x4xf32, #tpu.memory_space<vmem>>, vector<1x1x4xf32>,
    return
  }
  func.func @transform_0(%arg0: i32) -> (i32, i32) {
    %c0_i32 = arith.constant 0 : i32
    %c0_i32_0 = arith.constant 0 : i32
    return %arg0, %c0_i32 : i32, i32
  }
  func.func @transform_1(%arg0: i32) -> (i32, i32) {
    %c0_i32 = arith.constant 0 : i32
    %c0_i32_0 = arith.constant 0 : i32
    %c0_i32_1 = arith.constant 0 : i32
    return %c0_i32, %c0_i32_0 : i32, i32
  }
  func.func @transform_2(%arg0: i32) -> (i32, i32, i32) {
    %c0_i32 = arith.constant 0 : i32
    %c0_i32_0 = arith.constant 0 : i32
    %c0_i32_1 = arith.constant 0 : i32
    return %arg0, %c0_i32, %c0_i32_0 : i32, i32, i32
  }
}

</mosaic_0001>

<llo_original>
// kernel: tpu_custom_call.1
$region0: #{tpu_custom_call.1}
  #allocation0 [shape = 'u32[]', space=smem, size = 0x4, offset = 0x4, fixed_abs, tag = 'smem constant byte address 0x4 - core index']
  #allocation1 [shape = 'u32[144,128]{1,0:T(1,128)}', space=vmem, size = 0x12000, scoped, tag = 'internal scratch']
  %s0 = inlined_call_operand.hbm [shape: f32[4,10], index: 0, kind: input, shape index: {}]
  %s1 = inlined_call_operand.vmem [shape: f32[1,10], index: 1, kind: input, shape index: {}]
  %s2 = inlined_call_operand.hbm [shape: f32[1,1,4], index: 2, kind: output, shape index: {}]
  %s3 = sld [smem:[#allocation0]]
  $region22: #{tpu_custom_call.1} parent=0
    _
  %s5 = ssub.s32 1, %s3
  %s6 = scalar_select 0, %s5, %s3
  $region1: #{tpu_custom_call.1} parent=0
    #allocation2 [shape = 'u8[2048]{0}', space=vmem, size = 0x800, scoped, tag = 'input window, operand 0, single buffered']
    #allocation3 [shape = 's32[1]{0}', space=sflag, size = 0x4, scoped, tag = 'scoped memory for tpu_custom_call.1']
    #allocation4 [shape = 's32[1]{0}', space=sflag, size = 0x4, scoped, tag = 'scoped memory for tpu_custom_call.1']
    #allocation5 [shape = 'u8[512]{0}', space=vmem, size = 0x400, scoped, tag = 'output window, operand 0, single buffered']
    %7 = vsyncpa [#allocation3], 0
    %8 = vsyncpa [#allocation4], 0
    // Predicated region
    $region2: #{tpu_custom_call.1} parent=1 // pred_check
      _
    $region3: #{tpu_custom_call.1} parent=1 // pred_check_branch
      %10 = sbr.rel (0) target = $region5
    $region4: #{tpu_custom_call.1} parent=1 // pred_region
      %s12 = ssub.s32 64, 64
      %13 = vsyncadd [#allocation3], %s12
      %s15 = sshll.u32 [#allocation2], 4
      %s16 = int_to_ptr.vmem [resolvable:$true] %s15
      %18 = dma.hbm_to_vmem [thread:$0]  %s0, 64, %s16, [#allocation3]
    $region5: #{tpu_custom_call.1} parent=1 // pred_fallthru
      _
    // Predicated region
    $region6: #{tpu_custom_call.1} parent=1 // pred_check
      _
    $region7: #{tpu_custom_call.1} parent=1 // pred_check_branch
      %20 = sbr.rel (0) target = $region9
    $region8: #{tpu_custom_call.1} parent=1 // pred_region
      _
    $region9: #{tpu_custom_call.1} parent=1 // pred_fallthru
      _
    // Predicated region
    $region10: #{tpu_custom_call.1} parent=1 // pred_check
      _
    $region11: #{tpu_custom_call.1} parent=1 // pred_check_branch
      %22 = sbr.rel (0) target = $region13
    $region12: #{tpu_custom_call.1} parent=1 // pred_region
      %23 = dma.done [#allocation3], 64
    $region13: #{tpu_custom_call.1} parent=1 // pred_fallthru
      _
    %v24 = vld [vmem:[#allocation2] sm:$0xf]
    %v25 = vld [vmem:[%s1] sm:$0x1]
    %v27 = vlaneseq
    %v28 = vshrl.u32 %v27, 7
    %v29 = vsub.s32 0, %v28
    %v30 = vrot.slane %v25, %v29
    %v32 = vmul.f32 %v24, %v30
    %vm33 = vcmask 76800
    %v34 = vsel %vm33, %v32, 0.0
    %35 = vadd.xlane.f32.xlu0 %v34
    %v36 = vpop.xlane.xlu0 %35
    %v38 = vlaneseq
    %v39 = vand.u32 %v38, 127
    %v40 = vlaneseq
    %v41 = vshrl.u32 %v40, 7
    %v42 = vsub.s32 %v39, %v41
    %v43 = vrot.slane %v36, %v42
    %vm45 = vcmask 24576
    %46 = vst.msk [vmem:[#allocation5] sm:$0x1] %vm45, %v43
    // Predicated region
    $region14: #{tpu_custom_call.1} parent=1 // pred_check
      _
    $region15: #{tpu_custom_call.1} parent=1 // pred_check_branch
      %48 = sbr.rel (0) target = $region17
    $region16: #{tpu_custom_call.1} parent=1 // pred_region
      %s50 = ssub.s32 16, 16
      %51 = vsyncadd [#allocation4], %s50
      %s53 = sshll.u32 [#allocation5], 4
      %s54 = int_to_ptr.vmem [resolvable:$true] %s53
      %56 = dma.vmem_to_hbm [thread:$0]  %s54, 16, %s2, [#allocation4]
    $region17: #{tpu_custom_call.1} parent=1 // pred_fallthru
      _
    // Predicated region
    $region18: #{tpu_custom_call.1} parent=1 // pred_check
      _
    $region19: #{tpu_custom_call.1} parent=1 // pred_check_branch
      %58 = sbr.rel (0) target = $region21
    $region20: #{tpu_custom_call.1} parent=1 // pred_region
      %59 = dma.done [#allocation4], 16
    $region21: #{tpu_custom_call.1} parent=1 // pred_fallthru
      _
    %60 = vsyncpa [#allocation3], 1
    %61 = vsyncpa [#allocation4], 1

</llo_original>
